<compile_context>
chip_gen: v6e
topology: v6e:2x2x1
jax: 0.10.0
libtpu: 0.0.40
codegen_flags: <defaults>
</compile_context>

<pallas_src>
import jax
import jax.numpy as jnp
from jax.experimental import pallas as pl
from jax.experimental.pallas import tpu as pltpu


def skip_ae_kernel(xT_ref,
                   w1t_ref, b1_ref,
                   w2t_ref, b2_ref,
                   w34t_ref, b34_ref,
                   w5t_ref, b5_ref,
                   w6t_ref, b6_ref,
                   outT_ref):
    f32 = jnp.float32
    bf16 = jnp.bfloat16

    x = xT_ref[...]                                               # (in_dim, bt) bf16

    # encoder1: ReLU(W1^T @ x + b1)                               -> (32, bt)
    x1 = jnp.dot(w1t_ref[...], x, preferred_element_type=f32) + b1_ref[...]
    x1 = jnp.maximum(x1, 0.0)
    x1_b = x1.astype(bf16)

    # encoder2[0:2]: ReLU(W2^T @ x1 + b2)                         -> (16, bt)
    h = jnp.dot(w2t_ref[...], x1_b, preferred_element_type=f32) + b2_ref[...]
    h = jnp.maximum(h, 0.0)

    # fused encoder2[2] + decoder1: ReLU(W34^T @ h + b34)         -> (16, bt)
    x3 = jnp.dot(w34t_ref[...], h.astype(bf16), preferred_element_type=f32) + b34_ref[...]
    x3 = jnp.maximum(x3, 0.0)

    # decoder2[0:2]: sublane concat (feature axis) + single (32,48) matmul
    xc = jnp.concatenate([x3.astype(bf16), x1_b], axis=0)         # (48, bt)
    h2 = jnp.dot(w5t_ref[...], xc, preferred_element_type=f32) + b5_ref[...]
    h2 = jnp.maximum(h2, 0.0)

    # decoder2[2]: W6^T @ h2 + b6                                 -> (in_dim, bt)
    out = jnp.dot(w6t_ref[...], h2.astype(bf16), preferred_element_type=f32) + b6_ref[...]
    outT_ref[...] = out.astype(outT_ref.dtype)


def skip_autoencoder_forward(x, params, *, batch_tile=512):
    """x: (B, input_dim) float32. params: dict of weights (in,out) / biases (1,out)."""
    B, input_dim = x.shape
    f32, bf16 = jnp.float32, jnp.bfloat16

    # --- batch tiling: lane-dense tiles, pad B up to a multiple of the tile ------
    lane = 128
    batch_tile = max(lane, (int(batch_tile) // lane) * lane)      # multiple of 128
    b128 = ((B + lane - 1) // lane) * lane
    batch_tile = min(batch_tile, b128)                            # don't exceed padded batch
    num_tiles = -(-B // batch_tile)
    B_pad = num_tiles * batch_tile

    # --- weight prep: transpose, fold W3@W4, cast matmul operands to bf16 --------
    w1, b1 = params["w1"], params["b1"]
    w2, b2 = params["w2"], params["b2"]
    w3, b3 = params["w3"], params["b3"]
    w4, b4 = params["w4"], params["b4"]
    w5, b5 = params["w5"], params["b5"]
    w6, b6 = params["w6"], params["b6"]

    w34 = w3 @ w4            # (16, 16): exact fold, no nonlinearity between these layers
    b34 = b3 @ w4 + b4       # (1, 16)

    weight_args = (
        w1.T.astype(bf16), b1.T.astype(f32),
        w2.T.astype(bf16), b2.T.astype(f32),
        w34.T.astype(bf16), b34.T.astype(f32),
        w5.T.astype(bf16), b5.T.astype(f32),
        w6.T.astype(bf16), b6.T.astype(f32),
    )

    # transposed, lane-dense input: (input_dim, B_pad) bf16
    xT = jnp.pad(x.T, ((0, 0), (0, B_pad - B))).astype(bf16)

    def full_spec(arr):
        # tiny weight/bias: whole array resident, constant block index (no re-DMA)
        return pl.BlockSpec(arr.shape, lambda i: (0, 0))

    outT = pl.pallas_call(
        skip_ae_kernel,
        out_shape=jax.ShapeDtypeStruct((input_dim, B_pad), f32),
        grid=(num_tiles,),
        in_specs=[pl.BlockSpec((input_dim, batch_tile), lambda i: (0, i))]
                 + [full_spec(a) for a in weight_args],
        out_specs=pl.BlockSpec((input_dim, batch_tile), lambda i: (0, i)),
        compiler_params=pltpu.CompilerParams(
            dimension_semantics=("parallel",)),
    )(xT, *weight_args)

    return outT[:, :B].T


def init_params(key, input_dim):
    """Deterministic synthetic init. Weights stored as (in_dim, out_dim); biases as (1, out_dim)."""
    dims = [
        ("w1", "b1", input_dim, 32),
        ("w2", "b2", 32, 16),
        ("w3", "b3", 16, 8),
        ("w4", "b4", 8, 16),
        ("w5", "b5", 48, 32),
        ("w6", "b6", 32, input_dim),
    ]
    params = {}
    for wname, bname, d_in, d_out in dims:
        key, kw, kb = jax.random.split(key, 3)
        bound = 1.0 / jnp.sqrt(d_in)  # mimic PyTorch's default uniform init range
        params[wname] = jax.random.uniform(kw, (d_in, d_out), jnp.float32, -bound, bound)
        params[bname] = jax.random.uniform(kb, (1, d_out), jnp.float32, -bound, bound)
    return params


def reference_forward(x, params):
    """Plain-JAX f32 reference of the original forward (no fold, no bf16)."""
    relu = lambda v: jnp.maximum(v, 0.0)
    x1 = relu(x @ params["w1"] + params["b1"])
    h = relu(x1 @ params["w2"] + params["b2"])
    x2 = h @ params["w3"] + params["b3"]
    x3 = relu(x2 @ params["w4"] + params["b4"])
    xc = jnp.concatenate([x3, x1], axis=1)
    h2 = relu(xc @ params["w5"] + params["b5"])
    return h2 @ params["w6"] + params["b6"]


if __name__ == "__main__":
    input_dim = 7   # ['bytes_in','bytes_out'] + 3 time cols + 2 categorical cols
    batch = 8

    key = jax.random.PRNGKey(0)
    key, kx = jax.random.split(key)
    x = jax.random.normal(kx, (batch, input_dim), jnp.float32)
    params = init_params(key, input_dim)

    out = skip_autoencoder_forward(x, params)
    out = jax.block_until_ready(out)

    ref = reference_forward(x, params)
    assert out.shape == (batch, input_dim)
    # bf16 matmul operands -> relaxed tolerance vs the pure-f32 reference
    assert jnp.allclose(out, ref, atol=5e-2, rtol=5e-2), "mismatch vs reference"

    print("KERNEL_OK")
</pallas_src>

<mosaic_0001>
module attributes {stable_mosaic.version = 11 : i64} {
  func.func @skip_ae_kernel(%arg0: i32, %arg1: memref<7x128xbf16, #tpu.memory_space<vmem>>, %arg2: memref<32x7xbf16, #tpu.memory_space<vmem>>, %arg3: memref<32x1xf32, #tpu.memory_space<vmem>>, %arg4: memref<16x32xbf16, #tpu.memory_space<vmem>>, %arg5: memref<16x1xf32, #tpu.memory_space<vmem>>, %arg6: memref<16x16xbf16, #tpu.memory_space<vmem>>, %arg7: memref<16x1xf32, #tpu.memory_space<vmem>>, %arg8: memref<32x48xbf16, #tpu.memory_space<vmem>>, %arg9: memref<32x1xf32, #tpu.memory_space<vmem>>, %arg10: memref<7x32xbf16, #tpu.memory_space<vmem>>, %arg11: memref<7x1xf32, #tpu.memory_space<vmem>>, %arg12: memref<7x128xf32, #tpu.memory_space<vmem>>) attributes {dimension_semantics = [#tpu.dimension_semantics<parallel>], iteration_bounds = array<i64: 1>, scalar_prefetch = 0 : i64, scratch_operands = 0 : i64, tpu.core_type = #tpu.core_type<tc>, window_params = [{transform_indices = @transform_0, window_bounds = array<i64: 7, 128>}, {pipeline_mode = #tpu.pipeline_mode<synchronous>, transform_indices = @transform_1, window_bounds = array<i64: 32, 7>}, {pipeline_mode = #tpu.pipeline_mode<synchronous>, transform_indices = @transform_2, window_bounds = array<i64: 32, 1>}, {pipeline_mode = #tpu.pipeline_mode<synchronous>, transform_indices = @transform_3, window_bounds = array<i64: 16, 32>}, {pipeline_mode = #tpu.pipeline_mode<synchronous>, transform_indices = @transform_4, window_bounds = array<i64: 16, 1>}, {pipeline_mode = #tpu.pipeline_mode<synchronous>, transform_indices = @transform_5, window_bounds = array<i64: 16, 16>}, {pipeline_mode = #tpu.pipeline_mode<synchronous>, transform_indices = @transform_6, window_bounds = array<i64: 16, 1>}, {pipeline_mode = #tpu.pipeline_mode<synchronous>, transform_indices = @transform_7, window_bounds = array<i64: 32, 48>}, {pipeline_mode = #tpu.pipeline_mode<synchronous>, transform_indices = @transform_8, window_bounds = array<i64: 32, 1>}, {pipeline_mode = #tpu.pipeline_mode<synchronous>, transform_indices = @transform_9, window_bounds = array<i64: 7, 32>}, {pipeline_mode = #tpu.pipeline_mode<synchronous>, transform_indices = @transform_10, window_bounds = array<i64: 7, 1>}, {transform_indices = @transform_11, window_bounds = array<i64: 7, 128>}]} {
    %c0 = arith.constant 0 : index
    %c0_0 = arith.constant 0 : index
    %0 = vector.load %arg1[%c0, %c0_0] : memref<7x128xbf16, #tpu.memory_space<vmem>>, vector<7x128xbf16>
    %c0_1 = arith.constant 0 : index
    %c0_2 = arith.constant 0 : index
    %1 = vector.load %arg2[%c0_1, %c0_2] : memref<32x7xbf16, #tpu.memory_space<vmem>>, vector<32x7xbf16>
    %cst = arith.constant dense<0.000000e+00> : vector<32x128xf32>
    %2 = tpu.matmul %1, %0, %cst {dimension_numbers = #tpu.dot_dimension_numbers<[1], [0], [0], [1], [0, 0, 1, 1], [], []>} : vector<32x7xbf16>, vector<7x128xbf16>, vector<32x128xf32> -> vector<32x128xf32>
    %c0_3 = arith.constant 0 : index
    %c0_4 = arith.constant 0 : index
    %3 = vector.load %arg3[%c0_3, %c0_4] : memref<32x1xf32, #tpu.memory_space<vmem>>, vector<32x1xf32>
    %4 = vector.broadcast %3 : vector<32x1xf32> to vector<32x128xf32>
    %5 = arith.addf %2, %4 : vector<32x128xf32>
    %cst_5 = arith.constant 0.000000e+00 : f32
    %6 = vector.broadcast %cst_5 : f32 to vector<32x128xf32>
    %7 = arith.maximumf %5, %6 : vector<32x128xf32>
    %8 = arith.truncf %7 : vector<32x128xf32> to vector<32x128xbf16>
    %c0_6 = arith.constant 0 : index
    %c0_7 = arith.constant 0 : index
    %9 = vector.load %arg4[%c0_6, %c0_7] : memref<16x32xbf16, #tpu.memory_space<vmem>>, vector<16x32xbf16>
    %cst_8 = arith.constant dense<0.000000e+00> : vector<16x128xf32>
    %10 = tpu.matmul %9, %8, %cst_8 {dimension_numbers = #tpu.dot_dimension_numbers<[1], [0], [0], [1], [0, 0, 1, 1], [], []>} : vector<16x32xbf16>, vector<32x128xbf16>, vector<16x128xf32> -> vector<16x128xf32>
    %c0_9 = arith.constant 0 : index
    %c0_10 = arith.constant 0 : index
    %11 = vector.load %arg5[%c0_9, %c0_10] : memref<16x1xf32, #tpu.memory_space<vmem>>, vector<16x1xf32>
    %12 = vector.broadcast %11 : vector<16x1xf32> to vector<16x128xf32>
    %13 = arith.addf %10, %12 : vector<16x128xf32>
    %cst_11 = arith.constant 0.000000e+00 : f32
    %14 = vector.broadcast %cst_11 : f32 to vector<16x128xf32>
    %15 = arith.maximumf %13, %14 : vector<16x128xf32>
    %c0_12 = arith.constant 0 : index
    %c0_13 = arith.constant 0 : index
    %16 = vector.load %arg6[%c0_12, %c0_13] : memref<16x16xbf16, #tpu.memory_space<vmem>>, vector<16x16xbf16>
    %17 = arith.truncf %15 : vector<16x128xf32> to vector<16x128xbf16>
    %cst_14 = arith.constant dense<0.000000e+00> : vector<16x128xf32>
    %18 = tpu.matmul %16, %17, %cst_14 {dimension_numbers = #tpu.dot_dimension_numbers<[1], [0], [0], [1], [0, 0, 1, 1], [], []>} : vector<16x16xbf16>, vector<16x128xbf16>, vector<16x128xf32> -> vector<16x128xf32>
    %c0_15 = arith.constant 0 : index
    %c0_16 = arith.constant 0 : index
    %19 = vector.load %arg7[%c0_15, %c0_16] : memref<16x1xf32, #tpu.memory_space<vmem>>, vector<16x1xf32>
    %20 = vector.broadcast %19 : vector<16x1xf32> to vector<16x128xf32>
    %21 = arith.addf %18, %20 : vector<16x128xf32>
    %cst_17 = arith.constant 0.000000e+00 : f32
    %22 = vector.broadcast %cst_17 : f32 to vector<16x128xf32>
    %23 = arith.maximumf %21, %22 : vector<16x128xf32>
    %24 = arith.truncf %23 : vector<16x128xf32> to vector<16x128xbf16>
    %25 = tpu.concatenate %24, %8 in 0 : vector<16x128xbf16>, vector<32x128xbf16> -> vector<48x128xbf16>
    %c0_18 = arith.constant 0 : index
    %c0_19 = arith.constant 0 : index
    %26 = vector.load %arg8[%c0_18, %c0_19] : memref<32x48xbf16, #tpu.memory_space<vmem>>, vector<32x48xbf16>
    %cst_20 = arith.constant dense<0.000000e+00> : vector<32x128xf32>
    %27 = tpu.matmul %26, %25, %cst_20 {dimension_numbers = #tpu.dot_dimension_numbers<[1], [0], [0], [1], [0, 0, 1, 1], [], []>} : vector<32x48xbf16>, vector<48x128xbf16>, vector<32x128xf32> -> vector<32x128xf32>
    %c0_21 = arith.constant 0 : index
    %c0_22 = arith.constant 0 : index
    %28 = vector.load %arg9[%c0_21, %c0_22] : memref<32x1xf32, #tpu.memory_space<vmem>>, vector<32x1xf32>
    %29 = vector.broadcast %28 : vector<32x1xf32> to vector<32x128xf32>
    %30 = arith.addf %27, %29 : vector<32x128xf32>
    %cst_23 = arith.constant 0.000000e+00 : f32
    %31 = vector.broadcast %cst_23 : f32 to vector<32x128xf32>
    %32 = arith.maximumf %30, %31 : vector<32x128xf32>
    %c0_24 = arith.constant 0 : index
    %c0_25 = arith.constant 0 : index
    %33 = vector.load %arg10[%c0_24, %c0_25] : memref<7x32xbf16, #tpu.memory_space<vmem>>, vector<7x32xbf16>
    %34 = arith.truncf %32 : vector<32x128xf32> to vector<32x128xbf16>
    %cst_26 = arith.constant dense<0.000000e+00> : vector<7x128xf32>
    %35 = tpu.matmul %33, %34, %cst_26 {dimension_numbers = #tpu.dot_dimension_numbers<[1], [0], [0], [1], [0, 0, 1, 1], [], []>} : vector<7x32xbf16>, vector<32x128xbf16>, vector<7x128xf32> -> vector<7x128xf32>
    %c0_27 = arith.constant 0 : index
    %c0_28 = arith.constant 0 : index
    %36 = vector.load %arg11[%c0_27, %c0_28] : memref<7x1xf32, #tpu.memory_space<vmem>>, vector<7x1xf32>
    %37 = vector.broadcast %36 : vector<7x1xf32> to vector<7x128xf32>
    %38 = arith.addf %35, %37 : vector<7x128xf32>
    %c0_29 = arith.constant 0 : index
    %c0_30 = arith.constant 0 : index
    %39 = vector.load %arg12[%c0_29, %c0_30] : memref<7x128xf32, #tpu.memory_space<vmem>>, vector<7x128xf32>
    tpu.vector_store %arg12[%c0_29, %c0_30], %38 {strides = array<i32>} : memref<7x128xf32, #tpu.memory_space<vmem>>, vector<7x128xf32>,
    return
  }
  func.func @transform_0(%arg0: i32) -> (i32, i32) {
    %c0_i32 = arith.constant 0 : i32
    %c0_i32_0 = arith.constant 0 : i32
    return %c0_i32, %arg0 : i32, i32
  }
  func.func @transform_1(%arg0: i32) -> (i32, i32) {
    %c0_i32 = arith.constant 0 : i32
    %c0_i32_0 = arith.constant 0 : i32
    %c0_i32_1 = arith.constant 0 : i32
    return %c0_i32, %c0_i32_0 : i32, i32
  }
  func.func @transform_2(%arg0: i32) -> (i32, i32) {
    %c0_i32 = arith.constant 0 : i32
    %c0_i32_0 = arith.constant 0 : i32
    %c0_i32_1 = arith.constant 0 : i32
    return %c0_i32, %c0_i32_0 : i32, i32
  }
  func.func @transform_3(%arg0: i32) -> (i32, i32) {
    %c0_i32 = arith.constant 0 : i32
    %c0_i32_0 = arith.constant 0 : i32
    %c0_i32_1 = arith.constant 0 : i32
    return %c0_i32, %c0_i32_0 : i32, i32
  }
  func.func @transform_4(%arg0: i32) -> (i32, i32) {
    %c0_i32 = arith.constant 0 : i32
    %c0_i32_0 = arith.constant 0 : i32
    %c0_i32_1 = arith.constant 0 : i32
    return %c0_i32, %c0_i32_0 : i32, i32
  }
  func.func @transform_5(%arg0: i32) -> (i32, i32) {
    %c0_i32 = arith.constant 0 : i32
    %c0_i32_0 = arith.constant 0 : i32
    %c0_i32_1 = arith.constant 0 : i32
    return %c0_i32, %c0_i32_0 : i32, i32
  }
  func.func @transform_6(%arg0: i32) -> (i32, i32) {
    %c0_i32 = arith.constant 0 : i32
    %c0_i32_0 = arith.constant 0 : i32
    %c0_i32_1 = arith.constant 0 : i32
    return %c0_i32, %c0_i32_0 : i32, i32
  }
  func.func @transform_7(%arg0: i32) -> (i32, i32) {
    %c0_i32 = arith.constant 0 : i32
    %c0_i32_0 = arith.constant 0 : i32
    %c0_i32_1 = arith.constant 0 : i32
    return %c0_i32, %c0_i32_0 : i32, i32
  }
  func.func @transform_8(%arg0: i32) -> (i32, i32) {
    %c0_i32 = arith.constant 0 : i32
    %c0_i32_0 = arith.constant 0 : i32
    %c0_i32_1 = arith.constant 0 : i32
    return %c0_i32, %c0_i32_0 : i32, i32
  }
  func.func @transform_9(%arg0: i32) -> (i32, i32) {
    %c0_i32 = arith.constant 0 : i32
    %c0_i32_0 = arith.constant 0 : i32
    %c0_i32_1 = arith.constant 0 : i32
    return %c0_i32, %c0_i32_0 : i32, i32
  }
  func.func @transform_10(%arg0: i32) -> (i32, i32) {
    %c0_i32 = arith.constant 0 : i32
    %c0_i32_0 = arith.constant 0 : i32
    %c0_i32_1 = arith.constant 0 : i32
    return %c0_i32, %c0_i32_0 : i32, i32
  }
  func.func @transform_11(%arg0: i32) -> (i32, i32) {
    %c0_i32 = arith.constant 0 : i32
    %c0_i32_0 = arith.constant 0 : i32
    return %c0_i32, %arg0 : i32, i32
  }
}

</mosaic_0001>

<llo_original>
// kernel: tpu_custom_call.1
$region0: #{tpu_custom_call.1}
  #allocation0 [shape = 'u32[]', space=smem, size = 0x4, offset = 0x4, fixed_abs, tag = 'smem constant byte address 0x4 - core index']
  #allocation1 [shape = 'u32[144,128]{1,0:T(1,128)}', space=vmem, size = 0x12000, scoped, tag = 'internal scratch']
  %s0 = inlined_call_operand.vmem [shape: bf16[7,128], index: 0, kind: input, shape index: {}]
  %s1 = inlined_call_operand.vmem [shape: bf16[32,7], index: 1, kind: input, shape index: {}]
  %s2 = inlined_call_operand.vmem [shape: f32[32,1], index: 2, kind: input, shape index: {}]
  %s3 = inlined_call_operand.vmem [shape: bf16[16,32], index: 3, kind: input, shape index: {}]
  %s4 = inlined_call_operand.vmem [shape: f32[16,1], index: 4, kind: input, shape index: {}]
  %s5 = inlined_call_operand.vmem [shape: bf16[16,16], index: 5, kind: input, shape index: {}]
  %s6 = inlined_call_operand.vmem [shape: f32[16,1], index: 6, kind: input, shape index: {}]
  %s7 = inlined_call_operand.vmem [shape: bf16[32,48], index: 7, kind: input, shape index: {}]
  %s8 = inlined_call_operand.vmem [shape: f32[32,1], index: 8, kind: input, shape index: {}]
  %s9 = inlined_call_operand.vmem [shape: bf16[7,32], index: 9, kind: input, shape index: {}]
  %s10 = inlined_call_operand.vmem [shape: f32[7,1], index: 10, kind: input, shape index: {}]
  %s11 = inlined_call_operand.hbm [shape: f32[7,128], index: 11, kind: output, shape index: {}]
  %s12 = sld [smem:[#allocation0]]
  $region54: #{tpu_custom_call.1} parent=0
    _
  %s14 = ssub.s32 1, %s12
  %s15 = scalar_select 0, %s14, %s12
  $region1: #{tpu_custom_call.1} parent=0
    #allocation2 [shape = 'u8[4096]{0}', space=vmem, size = 0x1000, scoped, tag = 'output window, operand 0, single buffered']
    #allocation3 [shape = 's32[1]{0}', space=sflag, size = 0x4, scoped, tag = 'scoped memory for tpu_custom_call.1']
    %16 = vsyncpa [#allocation3], 0
    // Predicated region
    $region2: #{tpu_custom_call.1} parent=1 // pred_check
      _
    $region3: #{tpu_custom_call.1} parent=1 // pred_check_branch
      %18 = sbr.rel (0) target = $region5
    $region4: #{tpu_custom_call.1} parent=1 // pred_region
      _
    $region5: #{tpu_custom_call.1} parent=1 // pred_fallthru
      _
    // Predicated region
    $region6: #{tpu_custom_call.1} parent=1 // pred_check
      _
    $region7: #{tpu_custom_call.1} parent=1 // pred_check_branch
      %20 = sbr.rel (0) target = $region9
    $region8: #{tpu_custom_call.1} parent=1 // pred_region
      _
    $region9: #{tpu_custom_call.1} parent=1 // pred_fallthru
      _
    // Predicated region
    $region10: #{tpu_custom_call.1} parent=1 // pred_check
      _
    $region11: #{tpu_custom_call.1} parent=1 // pred_check_branch
      %22 = sbr.rel (0) target = $region13
    $region12: #{tpu_custom_call.1} parent=1 // pred_region
      _
    $region13: #{tpu_custom_call.1} parent=1 // pred_fallthru
      _
    // Predicated region
    $region14: #{tpu_custom_call.1} parent=1 // pred_check
      _
    $region15: #{tpu_custom_call.1} parent=1 // pred_check_branch
      %24 = sbr.rel (0) target = $region17
    $region16: #{tpu_custom_call.1} parent=1 // pred_region
      _
    $region17: #{tpu_custom_call.1} parent=1 // pred_fallthru
      _
    // Predicated region
    $region18: #{tpu_custom_call.1} parent=1 // pred_check
      _
    $region19: #{tpu_custom_call.1} parent=1 // pred_check_branch
      %26 = sbr.rel (0) target = $region21
    $region20: #{tpu_custom_call.1} parent=1 // pred_region
      _
    $region21: #{tpu_custom_call.1} parent=1 // pred_fallthru
      _
    // Predicated region
    $region22: #{tpu_custom_call.1} parent=1 // pred_check
      _
    $region23: #{tpu_custom_call.1} parent=1 // pred_check_branch
      %28 = sbr.rel (0) target = $region25
    $region24: #{tpu_custom_call.1} parent=1 // pred_region
      _
    $region25: #{tpu_custom_call.1} parent=1 // pred_fallthru
      _
    // Predicated region
    $region26: #{tpu_custom_call.1} parent=1 // pred_check
      _
    $region27: #{tpu_custom_call.1} parent=1 // pred_check_branch
      %30 = sbr.rel (0) target = $region29
    $region28: #{tpu_custom_call.1} parent=1 // pred_region
      _
    $region29: #{tpu_custom_call.1} parent=1 // pred_fallthru
      _
    // Predicated region
    $region30: #{tpu_custom_call.1} parent=1 // pred_check
      _
    $region31: #{tpu_custom_call.1} parent=1 // pred_check_branch
      %32 = sbr.rel (0) target = $region33
    $region32: #{tpu_custom_call.1} parent=1 // pred_region
      _
    $region33: #{tpu_custom_call.1} parent=1 // pred_fallthru
      _
    // Predicated region
    $region34: #{tpu_custom_call.1} parent=1 // pred_check
      _
    $region35: #{tpu_custom_call.1} parent=1 // pred_check_branch
      %34 = sbr.rel (0) target = $region37
    $region36: #{tpu_custom_call.1} parent=1 // pred_region
      _
    $region37: #{tpu_custom_call.1} parent=1 // pred_fallthru
      _
    // Predicated region
    $region38: #{tpu_custom_call.1} parent=1 // pred_check
      _
    $region39: #{tpu_custom_call.1} parent=1 // pred_check_branch
      %36 = sbr.rel (0) target = $region41
    $region40: #{tpu_custom_call.1} parent=1 // pred_region
      _
    $region41: #{tpu_custom_call.1} parent=1 // pred_fallthru
      _
    // Predicated region
    $region42: #{tpu_custom_call.1} parent=1 // pred_check
      _
    $region43: #{tpu_custom_call.1} parent=1 // pred_check_branch
      %38 = sbr.rel (0) target = $region45
    $region44: #{tpu_custom_call.1} parent=1 // pred_region
      _
    $region45: #{tpu_custom_call.1} parent=1 // pred_fallthru
      _
    %v40 = vld [vmem:[%s0] sm:$0xf]
    %v41 = vld [vmem:[%s1] sm:$0xf]
    %v42 = vld [vmem:[%s1 + $0x4] sm:$0xf]
    %v43 = vld [vmem:[%s1 + $0x8] sm:$0xf]
    %v44 = vld [vmem:[%s1 + $0xc] sm:$0xf]
    %v45 = vld [vmem:[%s2] sm:$0xff]
    %v46 = vld [vmem:[%s2 + $0x8] sm:$0xff]
    %v47 = vld [vmem:[%s2 + $0x10] sm:$0xff]
    %v48 = vld [vmem:[%s2 + $0x18] sm:$0xff]
    %50 = vset.pattern.permute.xlu0 0
    %51 = vperm.xlu0 %50, %v45
    %v52 = vpop.permute.xlu0 %51
    %55 = vset.pattern.permute.xlu0 0
    %56 = vperm.xlu0 %55, %v46
    %v57 = vpop.permute.xlu0 %56
    %60 = vset.pattern.permute.xlu0 0
    %61 = vperm.xlu0 %60, %v47
    %v62 = vpop.permute.xlu0 %61
    %65 = vset.pattern.permute.xlu0 0
    %66 = vperm.xlu0 %65, %v48
    %v67 = vpop.permute.xlu0 %66
    %v73 = vunpack.c.l.b16 %v41
    %v74 = vunpack.c.l.b16 %v42
    %v75 = vunpack.c.l.b16 %v43
    %v76 = vunpack.c.l.b16 %v44
    %v77 = vpack.c.b16 %v74, %v73
    %v78 = vpack.c.b16 %v76, %v75
    %vm79 = vcmask 56320
    %v81 = vsel %vm79, %v77, 0
    %v84 = vsel %vm79, %v78, 0
    %vm86 = vcmask 1042432
    %vm87 = vcmask 1043456
    %v88 = vsel %vm86, 4294967295, 65535
    %v89 = vsel %vm87, %v88, 0
    %v91 = vand.u32 %v40, %v89
    %93 = vmatprep.subr.bf16.mxu0 0
    %94 = vmatpush1.bf16.msra.mxu0 0
    %95 = vmatprep.subr.bf16.mxu0 0
    %96 = vmatpush1.bf16.msra.mxu0 0
    %97 = vmatprep.subr.bf16.mxu0 0
    %98 = vmatpush1.bf16.msra.mxu0 0
    %99 = vmatprep.subr.bf16.mxu0 0
    %100 = vmatpush1.bf16.msra.mxu0 0
    %101 = vmatprep.subr.bf16.mxu0 0
    %102 = vmatpush1.bf16.msra.mxu0 0
    %103 = vmatprep.subr.bf16.mxu0 0
    %104 = vmatpush1.bf16.msra.mxu0 0
    %105 = vmatprep.subr.bf16.mxu0 0
    %106 = vmatpush1.bf16.msra.mxu0 0
    %107 = vmatprep.subr.bf16.mxu0 0
    %108 = vmatpush1.bf16.msra.mxu0 %v91
    %109 = vmatprep.subr.bf16.mxu0 0
    %110 = vmatpush2.bf16.msra.mxu0 0
    %111 = vmatprep.subr.bf16.mxu0 0
    %112 = vmatpush2.bf16.msra.mxu0 0
    %113 = vmatprep.subr.bf16.mxu0 0
    %114 = vmatpush2.bf16.msra.mxu0 0
    %115 = vmatprep.subr.bf16.mxu0 0
    %116 = vmatpush2.bf16.msra.mxu0 0
    %117 = vmatprep.subr.bf16.mxu0 0
    %118 = vmatpush2.bf16.msra.mxu0 0
    %119 = vmatprep.subr.bf16.mxu0 0
    %120 = vmatpush2.bf16.msra.mxu0 0
    %121 = vmatprep.subr.bf16.mxu0 0
    %122 = vmatpush2.bf16.msra.mxu0 0
    %123 = vmatprep.subr.bf16.mxu0 0
    %124 = vmatpush2.bf16.msra.mxu0 0
    %125 = vmatprep.mubr.bf16.mxu0 0
    %126 = vmatmul.mubr.bf16.gmra.mxu0 %v81
    %v127 = vpop.f32.mrf.mxu0
    %v128 = vadd.f32 %v52, %v127
    %v129 = vpop.f32.mrf.mxu0
    %v130 = vpop.f32.mrf.mxu0
    %v131 = vadd.f32 %v57, %v130
    %v132 = vpop.f32.mrf.mxu0
    %133 = vmatprep.mubr.bf16.mxu0 0
    %134 = vmatmul.mubr.bf16.gmra.mxu0 %v84
    %v135 = vpop.f32.mrf.mxu0
    %v136 = vadd.f32 %v62, %v135
    %v137 = vpop.f32.mrf.mxu0
    %v138 = vpop.f32.mrf.mxu0
    %v139 = vadd.f32 %v67, %v138
    %v140 = vpop.f32.mrf.mxu0
    %141 = vdwg.mxu0
    %v142 = vmax.f32 %v128, 0.0
    %v143 = vmax.f32 %v131, 0.0
    %v144 = vmax.f32 %v136, 0.0
    %v145 = vmax.f32 %v139, 0.0
    %v146 = vpack.c.bf16 %v143, %v142
    %v147 = vpack.c.bf16 %v145, %v144
    %v148 = vld [vmem:[%s3] sm:$0xf]
    %v149 = vld [vmem:[%s3 + $0x4] sm:$0xf]
    %v150 = vld [vmem:[%s4] sm:$0xff]
    %v151 = vld [vmem:[%s4 + $0x8] sm:$0xff]
    %153 = vset.pattern.permute.xlu0 0
    %154 = vperm.xlu0 %153, %v150
    %v155 = vpop.permute.xlu0 %154
    %158 = vset.pattern.permute.xlu0 0
    %159 = vperm.xlu0 %158, %v151
    %v160 = vpop.permute.xlu0 %159
    %v164 = vunpack.c.l.b16 %v148
    %v165 = vunpack.c.l.b16 %v149
    %v166 = vpack.c.b16 %v165, %v164
    %vm167 = vcmask 261120
    %v169 = vsel %vm167, %v166, 0
    %171 = vmatprep.subr.bf16.mxu0 0
    %172 = vmatpush1.bf16.msra.mxu0 0
    %173 = vmatprep.subr.bf16.mxu0 0
    %174 = vmatpush1.bf16.msra.mxu0 0
    %175 = vmatprep.subr.bf16.mxu0 0
    %176 = vmatpush1.bf16.msra.mxu0 0
    %177 = vmatprep.subr.bf16.mxu0 0
    %178 = vmatpush1.bf16.msra.mxu0 0
    %179 = vmatprep.subr.bf16.mxu0 0
    %180 = vmatpush1.bf16.msra.mxu0 0
    %181 = vmatprep.subr.bf16.mxu0 0
    %182 = vmatpush1.bf16.msra.mxu0 0
    %183 = vmatprep.subr.bf16.mxu0 0
    %184 = vmatpush1.bf16.msra.mxu0 %v147
    %185 = vmatprep.subr.bf16.mxu0 0
    %186 = vmatpush1.bf16.msra.mxu0 %v146
    %187 = vmatprep.subr.bf16.mxu0 0
    %188 = vmatpush2.bf16.msra.mxu0 0
    %189 = vmatprep.subr.bf16.mxu0 0
    %190 = vmatpush2.bf16.msra.mxu0 0
    %191 = vmatprep.subr.bf16.mxu0 0
    %192 = vmatpush2.bf16.msra.mxu0 0
    %193 = vmatprep.subr.bf16.mxu0 0
    %194 = vmatpush2.bf16.msra.mxu0 0
    %195 = vmatprep.subr.bf16.mxu0 0
    %196 = vmatpush2.bf16.msra.mxu0 0
    %197 = vmatprep.subr.bf16.mxu0 0
    %198 = vmatpush2.bf16.msra.mxu0 0
    %199 = vmatprep.subr.bf16.mxu0 0
    %200 = vmatpush2.bf16.msra.mxu0 0
    %201 = vmatprep.subr.bf16.mxu0 0
    %202 = vmatpush2.bf16.msra.mxu0 0
    %203 = vmatprep.mubr.bf16.mxu0 0
    %204 = vmatmul.mubr.bf16.gmra.mxu0 %v169
    %v205 = vpop.f32.mrf.mxu0
    %v206 = vadd.f32 %v155, %v205
    %v207 = vpop.f32.mrf.mxu0
    %v208 = vpop.f32.mrf.mxu0
    %v209 = vadd.f32 %v160, %v208
    %v210 = vpop.f32.mrf.mxu0
    %211 = vdwg.mxu0
    %v212 = vmax.f32 %v206, 0.0
    %v213 = vmax.f32 %v209, 0.0
    %v214 = vld [vmem:[%s5] sm:$0xf]
    %v215 = vld [vmem:[%s5 + $0x4] sm:$0xf]
    %v216 = vpack.c.bf16 %v213, %v212
    %v217 = vld [vmem:[%s6] sm:$0xff]
    %v218 = vld [vmem:[%s6 + $0x8] sm:$0xff]
    %220 = vset.pattern.permute.xlu0 0
    %221 = vperm.xlu0 %220, %v217
    %v222 = vpop.permute.xlu0 %221
    %225 = vset.pattern.permute.xlu0 0
    %226 = vperm.xlu0 %225, %v218
    %v227 = vpop.permute.xlu0 %226
    %v231 = vunpack.c.l.b16 %v214
    %v232 = vunpack.c.l.b16 %v215
    %v233 = vpack.c.b16 %v232, %v231
    %vm234 = vcmask 130048
    %v236 = vsel %vm234, %v233, 0
    %238 = vmatprep.subr.bf16.mxu0 0
    %239 = vmatpush1.bf16.msra.mxu0 0
    %240 = vmatprep.subr.bf16.mxu0 0
    %241 = vmatpush1.bf16.msra.mxu0 0
    %242 = vmatprep.subr.bf16.mxu0 0
    %243 = vmatpush1.bf16.msra.mxu0 0
    %244 = vmatprep.subr.bf16.mxu0 0
    %245 = vmatpush1.bf16.msra.mxu0 0
    %246 = vmatprep.subr.bf16.mxu0 0
    %247 = vmatpush1.bf16.msra.mxu0 0
    %248 = vmatprep.subr.bf16.mxu0 0
    %249 = vmatpush1.bf16.msra.mxu0 0
    %250 = vmatprep.subr.bf16.mxu0 0
    %251 = vmatpush1.bf16.msra.mxu0 0
    %252 = vmatprep.subr.bf16.mxu0 0
    %253 = vmatpush1.bf16.msra.mxu0 %v216
    %254 = vmatprep.subr.bf16.mxu0 0
    %255 = vmatpush2.bf16.msra.mxu0 0
    %256 = vmatprep.subr.bf16.mxu0 0
    %257 = vmatpush2.bf16.msra.mxu0 0
    %258 = vmatprep.subr.bf16.mxu0 0
    %259 = vmatpush2.bf16.msra.mxu0 0
    %260 = vmatprep.subr.bf16.mxu0 0
    %261 = vmatpush2.bf16.msra.mxu0 0
    %262 = vmatprep.subr.bf16.mxu0 0
    %263 = vmatpush2.bf16.msra.mxu0 0
    %264 = vmatprep.subr.bf16.mxu0 0
    %265 = vmatpush2.bf16.msra.mxu0 0
    %266 = vmatprep.subr.bf16.mxu0 0
    %267 = vmatpush2.bf16.msra.mxu0 0
    %268 = vmatprep.subr.bf16.mxu0 0
    %269 = vmatpush2.bf16.msra.mxu0 0
    %270 = vmatprep.mubr.bf16.mxu0 0
    %271 = vmatmul.mubr.bf16.gmra.mxu0 %v236
    %v272 = vpop.f32.mrf.mxu0
    %v273 = vadd.f32 %v222, %v272
    %v274 = vpop.f32.mrf.mxu0
    %v275 = vpop.f32.mrf.mxu0
    %v276 = vadd.f32 %v227, %v275
    %v277 = vpop.f32.mrf.mxu0
    %278 = vdwg.mxu0
    %v279 = vmax.f32 %v273, 0.0
    %v280 = vmax.f32 %v276, 0.0
    %v281 = vpack.c.bf16 %v280, %v279
    %v282 = vld [vmem:[%s7] sm:$0xf]
    %v283 = vld [vmem:[%s7 + $0x4] sm:$0xf]
    %v284 = vld [vmem:[%s7 + $0x8] sm:$0xf]
    %v285 = vld [vmem:[%s7 + $0xc] sm:$0xf]
    %v286 = vld [vmem:[%s8] sm:$0xff]
    %v287 = vld [vmem:[%s8 + $0x8] sm:$0xff]
    %v288 = vld [vmem:[%s8 + $0x10] sm:$0xff]
    %v289 = vld [vmem:[%s8 + $0x18] sm:$0xff]
    %291 = vset.pattern.permute.xlu0 0
    %292 = vperm.xlu0 %291, %v286
    %v293 = vpop.permute.xlu0 %292
    %296 = vset.pattern.permute.xlu0 0
    %297 = vperm.xlu0 %296, %v287
    %v298 = vpop.permute.xlu0 %297
    %301 = vset.pattern.permute.xlu0 0
    %302 = vperm.xlu0 %301, %v288
    %v303 = vpop.permute.xlu0 %302
    %306 = vset.pattern.permute.xlu0 0
    %307 = vperm.xlu0 %306, %v289
    %v308 = vpop.permute.xlu0 %307
    %v314 = vunpack.c.l.b16 %v282
    %v315 = vunpack.c.l.b16 %v283
    %v316 = vunpack.c.l.b16 %v284
    %v317 = vunpack.c.l.b16 %v285
    %v318 = vpack.c.b16 %v315, %v314
    %v319 = vpack.c.b16 %v317, %v316
    %vm320 = vcmask 392192
    %v322 = vsel %vm320, %v318, 0
    %v325 = vsel %vm320, %v319, 0
    %327 = vmatprep.subr.bf16.mxu0 0
    %328 = vmatpush1.bf16.msra.mxu0 0
    %329 = vmatprep.subr.bf16.mxu0 0
    %330 = vmatpush1.bf16.msra.mxu0 0
    %331 = vmatprep.subr.bf16.mxu0 0
    %332 = vmatpush1.bf16.msra.mxu0 0
    %333 = vmatprep.subr.bf16.mxu0 0
    %334 = vmatpush1.bf16.msra.mxu0 0
    %335 = vmatprep.subr.bf16.mxu0 0
    %336 = vmatpush1.bf16.msra.mxu0 0
    %337 = vmatprep.subr.bf16.mxu0 0
    %338 = vmatpush1.bf16.msra.mxu0 %v147
    %339 = vmatprep.subr.bf16.mxu0 0
    %340 = vmatpush1.bf16.msra.mxu0 %v146
    %341 = vmatprep.subr.bf16.mxu0 0
    %342 = vmatpush1.bf16.msra.mxu0 %v281
    %343 = vmatprep.subr.bf16.mxu0 0
    %344 = vmatpush2.bf16.msra.mxu0 0
    %345 = vmatprep.subr.bf16.mxu0 0
    %346 = vmatpush2.bf16.msra.mxu0 0
    %347 = vmatprep.subr.bf16.mxu0 0
    %348 = vmatpush2.bf16.msra.mxu0 0
    %349 = vmatprep.subr.bf16.mxu0 0
    %350 = vmatpush2.bf16.msra.mxu0 0
    %351 = vmatprep.subr.bf16.mxu0 0
    %352 = vmatpush2.bf16.msra.mxu0 0
    %353 = vmatprep.subr.bf16.mxu0 0
    %354 = vmatpush2.bf16.msra.mxu0 0
    %355 = vmatprep.subr.bf16.mxu0 0
    %356 = vmatpush2.bf16.msra.mxu0 0
    %357 = vmatprep.subr.bf16.mxu0 0
    %358 = vmatpush2.bf16.msra.mxu0 0
    %359 = vmatprep.mubr.bf16.mxu0 0
    %360 = vmatmul.mubr.bf16.gmra.mxu0 %v322
    %v361 = vpop.f32.mrf.mxu0
    %v362 = vadd.f32 %v293, %v361
    %v363 = vpop.f32.mrf.mxu0
    %v364 = vpop.f32.mrf.mxu0
    %v365 = vadd.f32 %v298, %v364
    %v366 = vpop.f32.mrf.mxu0
    %367 = vmatprep.mubr.bf16.mxu0 0
    %368 = vmatmul.mubr.bf16.gmra.mxu0 %v325
    %v369 = vpop.f32.mrf.mxu0
    %v370 = vadd.f32 %v303, %v369
    %v371 = vpop.f32.mrf.mxu0
    %v372 = vpop.f32.mrf.mxu0
    %v373 = vadd.f32 %v308, %v372
    %v374 = vpop.f32.mrf.mxu0
    %375 = vdwg.mxu0
    %v376 = vmax.f32 %v362, 0.0
    %v377 = vmax.f32 %v365, 0.0
    %v378 = vmax.f32 %v370, 0.0
    %v379 = vmax.f32 %v373, 0.0
    %v380 = vld [vmem:[%s9] sm:$0xf]
    %v381 = vpack.c.bf16 %v377, %v376
    %v382 = vpack.c.bf16 %v379, %v378
    %v383 = vld [vmem:[%s10] sm:$0x7f]
    %385 = vset.pattern.permute.xlu0 0
    %386 = vperm.xlu0 %385, %v383
    %v387 = vpop.permute.xlu0 %386
    %v390 = vsel %vm167, %v380, 0
    %392 = vmatprep.subr.bf16.mxu0 0
    %393 = vmatpush1.bf16.msra.mxu0 0
    %394 = vmatprep.subr.bf16.mxu0 0
    %395 = vmatpush1.bf16.msra.mxu0 0
    %396 = vmatprep.subr.bf16.mxu0 0
    %397 = vmatpush1.bf16.msra.mxu0 0
    %398 = vmatprep.subr.bf16.mxu0 0
    %399 = vmatpush1.bf16.msra.mxu0 0
    %400 = vmatprep.subr.bf16.mxu0 0
    %401 = vmatpush1.bf16.msra.mxu0 0
    %402 = vmatprep.subr.bf16.mxu0 0
    %403 = vmatpush1.bf16.msra.mxu0 0
    %404 = vmatprep.subr.bf16.mxu0 0
    %405 = vmatpush1.bf16.msra.mxu0 %v382
    %406 = vmatprep.subr.bf16.mxu0 0
    %407 = vmatpush1.bf16.msra.mxu0 %v381
    %408 = vmatprep.subr.bf16.mxu0 0
    %409 = vmatpush2.bf16.msra.mxu0 0
    %410 = vmatprep.subr.bf16.mxu0 0
    %411 = vmatpush2.bf16.msra.mxu0 0
    %412 = vmatprep.subr.bf16.mxu0 0
    %413 = vmatpush2.bf16.msra.mxu0 0
    %414 = vmatprep.subr.bf16.mxu0 0
    %415 = vmatpush2.bf16.msra.mxu0 0
    %416 = vmatprep.subr.bf16.mxu0 0
    %417 = vmatpush2.bf16.msra.mxu0 0
    %418 = vmatprep.subr.bf16.mxu0 0
    %419 = vmatpush2.bf16.msra.mxu0 0
    %420 = vmatprep.subr.bf16.mxu0 0
    %421 = vmatpush2.bf16.msra.mxu0 0
    %422 = vmatprep.subr.bf16.mxu0 0
    %423 = vmatpush2.bf16.msra.mxu0 0
    %424 = vmatprep.mubr.bf16.mxu0 0
    %425 = vmatmul.mubr.bf16.gmra.mxu0 %v390
    %v426 = vpop.f32.mrf.mxu0
    %v427 = vadd.f32 %v387, %v426
    %v428 = vpop.f32.mrf.mxu0
    %v429 = vpop.f32.mrf.mxu0
    %v430 = vpop.f32.mrf.mxu0
    %431 = vdwg.mxu0
    %432 = vst [vmem:[#allocation2] sm:$0x7f] %v427
    // Predicated region
    $region46: #{tpu_custom_call.1} parent=1 // pred_check
      _
    $region47: #{tpu_custom_call.1} parent=1 // pred_check_branch
      %434 = sbr.rel (0) target = $region49
    $region48: #{tpu_custom_call.1} parent=1 // pred_region
      %s436 = ssub.s32 128, 128
      %437 = vsyncadd [#allocation3], %s436
      %s439 = sshll.u32 [#allocation2], 4
      %s440 = int_to_ptr.vmem [resolvable:$true] %s439
      %442 = dma.vmem_to_hbm [thread:$0]  %s440, 128, %s11, [#allocation3]
    $region49: #{tpu_custom_call.1} parent=1 // pred_fallthru
      _
    // Predicated region
    $region50: #{tpu_custom_call.1} parent=1 // pred_check
      _
    $region51: #{tpu_custom_call.1} parent=1 // pred_check_branch
      %444 = sbr.rel (0) target = $region53
    $region52: #{tpu_custom_call.1} parent=1 // pred_region
      %445 = dma.done [#allocation3], 128
    $region53: #{tpu_custom_call.1} parent=1 // pred_fallthru
      _
    %446 = vsyncpa [#allocation3], 1

</llo_original>
